<compile_context>
chip_gen: v6e
topology: v6e:2x2x1
jax: 0.10.0
libtpu: 0.0.40
codegen_flags: <defaults>
</compile_context>

<pallas_src>
import functools

import numpy as np
import jax
import jax.numpy as jnp
from jax.experimental import pallas as pl
from jax.experimental.pallas import tpu as pltpu

C_IN, C_PAD, C1, C2, NCLASS, HID = 40, 64, 64, 128, 8, 128
BN_EPS = 1e-5


def _emotion_cnn_kernel(x_ref, w1_ref, b1_ref, w2_ref, b2_ref,
                        wf1m_ref, wf1x_ref, bf1_ref, wf2_ref, bf2_ref,
                        out_ref, h_scr, g_scr, gp_scr, *, t_len):
    f32 = jnp.float32
    cdt = w1_ref.dtype                       # compute dtype for MXU operands

    x = x_ref[...]                           # (M, C_PAD), M = Bb * T
    m = x.shape[0]
    t1 = t_len
    t2, t4 = t1 // 2, t1 // 4
    bb = m // t1
    m2, m4 = m // 2, m // 4

    def shifted_cat(v, period):
        # Rows are sample-major / time-minor. Build [v[t-1], v[t], v[t+1]]
        # along lanes; Conv1d(padding=1) halo rows at each sample's time
        # boundary are zeroed (roll wraps across samples, but exactly those
        # wrapped rows are the masked ones).
        rows = v.shape[0]
        r = jax.lax.broadcasted_iota(jnp.int32, (rows, 1), 0)
        prev = jnp.where(r % period == 0, 0.0,
                         pltpu.roll(v, shift=1, axis=0))
        nxt = jnp.where(r % period == period - 1, 0.0,
                        pltpu.roll(v, shift=rows - 1, axis=0))
        return jnp.concatenate([prev, v, nxt], axis=-1)

    # conv1 (k=3, pad=1) + BN1 (eval, folded into w1/b1) + relu
    h_scr[...] = jnp.maximum(
        jnp.dot(shifted_cat(x, t1).astype(cdt), w1_ref[...],
                preferred_element_type=f32) + b1_ref[...], 0.0)      # (M, C1)

    # MaxPool1d(2): max of even/odd time rows via sublane-strided reads
    hp = jnp.maximum(h_scr[pl.ds(0, m2, stride=2), :],
                     h_scr[pl.ds(1, m2, stride=2), :])               # (M/2, C1)

    # conv2 (k=3, pad=1) + BN2 (eval, folded) + relu
    g_scr[...] = jnp.maximum(
        jnp.dot(shifted_cat(hp, t2).astype(cdt), w2_ref[...],
                preferred_element_type=f32) + b2_ref[...], 0.0)      # (M/2, C2)

    gp_scr[...] = jnp.maximum(g_scr[pl.ds(0, m4, stride=2), :],
                              g_scr[pl.ds(1, m4, stride=2), :])      # (M/4, C2)

    # Global mean & max over time: gather time-step j of every sample with a
    # stride-t4 read -> (Bb, C2), then reduce over the (small, static) j loop.
    acc_s = gp_scr[pl.ds(0, bb, stride=t4), :]
    acc_m = acc_s
    for j in range(1, t4):
        rj = gp_scr[pl.ds(j, bb, stride=t4), :]
        acc_s = acc_s + rj
        acc_m = jnp.maximum(acc_m, rj)
    g_mean = acc_s * (1.0 / t4)                                      # (Bb, C2)

    # TODO(synk): nn.Dropout(0.3) is stochastic; applied as eval-mode identity.
    # fc1 split into mean/max halves (avoids a lane concat of the features)
    z = jnp.maximum(
        jnp.dot(g_mean.astype(cdt), wf1m_ref[...], preferred_element_type=f32)
        + jnp.dot(acc_m.astype(cdt), wf1x_ref[...], preferred_element_type=f32)
        + bf1_ref[...], 0.0)                                         # (Bb, 128)

    # fc2, zero-padded to 128 output lanes -> lane-dense (unmasked) store
    out_ref[...] = (jnp.dot(z.astype(cdt), wf2_ref[...],
                            preferred_element_type=f32) + bf2_ref[...])


def emotion_cnn_forward(x, params, *, block_b=64, compute_dtype=jnp.float32):
    """x: (B, T, 40) float32 -- same as the PyTorch module's input (pre-permute)."""
    B, T, c_in = x.shape
    assert c_in == C_IN and T % 4 == 0

    # ---- fold eval-mode BatchNorm (running stats) into conv weights/biases ----
    s1 = params["bn1_gamma"] / jnp.sqrt(params["bn1_var"] + BN_EPS)
    s2 = params["bn2_gamma"] / jnp.sqrt(params["bn2_var"] + BN_EPS)
    b1 = ((params["conv1_b"] - params["bn1_mean"]) * s1
          + params["bn1_beta"]).reshape(1, C1)
    b2 = ((params["conv2_b"] - params["bn2_mean"]) * s2
          + params["bn2_beta"]).reshape(1, C2)

    # per-tap conv weights (Cout, Cin, 3) -> (3, Cin_pad, Cout) -> (3*Cin_pad, Cout)
    w1t = jnp.transpose(params["conv1_w"] * s1[:, None, None], (2, 1, 0))
    w1t = jnp.pad(w1t, ((0, 0), (0, C_PAD - C_IN), (0, 0)))
    w1 = w1t.reshape(3 * C_PAD, C1).astype(compute_dtype)
    w2t = jnp.transpose(params["conv2_w"] * s2[:, None, None], (2, 1, 0))
    w2 = w2t.reshape(3 * C1, C2).astype(compute_dtype)

    # fc1 split into mean/max halves; fc2 zero-padded to 128 output classes
    wf1m = params["fc1_w"][:C2, :].astype(compute_dtype)             # (128, 128)
    wf1x = params["fc1_w"][C2:, :].astype(compute_dtype)             # (128, 128)
    bf1 = params["fc1_b"].reshape(1, HID)
    wf2 = jnp.pad(params["fc2_w"],
                  ((0, 0), (0, HID - NCLASS))).astype(compute_dtype)  # (128, 128)
    bf2 = jnp.pad(params["fc2_b"], (0, HID - NCLASS)).reshape(1, HID)

    # ---- batch blocking & input layout: (B, T, 40) -> (Bp*T, 64) ----
    bb = min(B, block_b)
    bp = pl.cdiv(B, bb) * bb
    xp = jnp.pad(x, ((0, bp - B), (0, 0), (0, C_PAD - C_IN)))
    x2 = xp.reshape(bp * T, C_PAD).astype(compute_dtype)
    m = bb * T

    consts = [w1, b1, w2, b2, wf1m, wf1x, bf1, wf2, bf2]

    def const_spec(a):
        nd = a.ndim
        return pl.BlockSpec(a.shape, lambda b, nd=nd: (0,) * nd)

    kernel = functools.partial(_emotion_cnn_kernel, t_len=T)
    out = pl.pallas_call(
        kernel,
        out_shape=jax.ShapeDtypeStruct((bp, HID), jnp.float32),
        grid_spec=pltpu.PrefetchScalarGridSpec(
            num_scalar_prefetch=0,
            grid=(bp // bb,),
            in_specs=([pl.BlockSpec((m, C_PAD), lambda b: (b, 0))]
                      + [const_spec(a) for a in consts]),
            out_specs=pl.BlockSpec((bb, HID), lambda b: (b, 0)),
            scratch_shapes=[pltpu.VMEM((m, C1), jnp.float32),
                            pltpu.VMEM((m // 2, C2), jnp.float32),
                            pltpu.VMEM((m // 4, C2), jnp.float32)],
        ),
        compiler_params=pltpu.CompilerParams(
            dimension_semantics=("parallel",)),
    )(x2, *consts)
    return out[:B, :NCLASS]


def init_params(key):
    ks = jax.random.split(key, 16)
    n, u = jax.random.normal, jax.random.uniform
    return {
        "conv1_w": 0.1 * n(ks[0], (C1, C_IN, 3), jnp.float32),
        "conv1_b": 0.1 * n(ks[1], (C1,), jnp.float32),
        "bn1_gamma": 1.0 + 0.1 * n(ks[2], (C1,), jnp.float32),
        "bn1_beta": 0.1 * n(ks[3], (C1,), jnp.float32),
        "bn1_mean": 0.1 * n(ks[4], (C1,), jnp.float32),
        "bn1_var": 0.5 + u(ks[5], (C1,), jnp.float32),
        "conv2_w": 0.1 * n(ks[6], (C2, C1, 3), jnp.float32),
        "conv2_b": 0.1 * n(ks[7], (C2,), jnp.float32),
        "bn2_gamma": 1.0 + 0.1 * n(ks[8], (C2,), jnp.float32),
        "bn2_beta": 0.1 * n(ks[9], (C2,), jnp.float32),
        "bn2_mean": 0.1 * n(ks[10], (C2,), jnp.float32),
        "bn2_var": 0.5 + u(ks[11], (C2,), jnp.float32),
        "fc1_w": 0.05 * n(ks[12], (2 * C2, HID), jnp.float32),
        "fc1_b": 0.05 * n(ks[13], (HID,), jnp.float32),
        "fc2_w": 0.05 * n(ks[14], (HID, NCLASS), jnp.float32),
        "fc2_b": 0.05 * n(ks[15], (NCLASS,), jnp.float32),
    }


def _reference_forward(x, p):
    """Plain-JAX reference mirroring the PyTorch forward (eval mode)."""
    xt = jnp.transpose(x, (0, 2, 1))                                 # (B, Cin, T)

    def conv_bn_relu(h, w, b, gamma, beta, mean, var):
        B_, Cin, T_ = h.shape
        hp = jnp.pad(h, ((0, 0), (0, 0), (1, 1)))
        y = sum(jnp.einsum('oi,bit->bot', w[:, :, k], hp[:, :, k:k + T_])
                for k in range(3))
        y = y + b[None, :, None]
        y = (y - mean[None, :, None]) / jnp.sqrt(var[None, :, None] + BN_EPS)
        y = y * gamma[None, :, None] + beta[None, :, None]
        return jax.nn.relu(y)

    def pool(h):
        B_, C_, T_ = h.shape
        return jnp.max(h.reshape(B_, C_, T_ // 2, 2), axis=-1)

    h = pool(conv_bn_relu(xt, p["conv1_w"], p["conv1_b"], p["bn1_gamma"],
                          p["bn1_beta"], p["bn1_mean"], p["bn1_var"]))
    g = pool(conv_bn_relu(h, p["conv2_w"], p["conv2_b"], p["bn2_gamma"],
                          p["bn2_beta"], p["bn2_mean"], p["bn2_var"]))
    feat = jnp.concatenate([g.mean(axis=2), g.max(axis=2)], axis=1)
    z = jax.nn.relu(feat @ p["fc1_w"] + p["fc1_b"])
    return z @ p["fc2_w"] + p["fc2_b"]


if __name__ == "__main__":
    key = jax.random.PRNGKey(0)
    k_x, k_p = jax.random.split(key)
    params = init_params(k_p)

    B, T = 2, 16
    x = jax.random.normal(k_x, (B, T, C_IN), jnp.float32)

    out = jax.block_until_ready(emotion_cnn_forward(x, params))
    ref = jax.block_until_ready(_reference_forward(x, params))

    assert out.shape == (B, NCLASS)
    np.testing.assert_allclose(np.asarray(out), np.asarray(ref),
                               rtol=1e-4, atol=1e-4)
    print("KERNEL_OK")
</pallas_src>

<mosaic_0001>
module attributes {stable_mosaic.version = 11 : i64} {
  func.func @_emotion_cnn_kernel(%arg0: i32, %arg1: memref<32x64xf32, #tpu.memory_space<vmem>>, %arg2: memref<192x64xf32, #tpu.memory_space<vmem>>, %arg3: memref<1x64xf32, #tpu.memory_space<vmem>>, %arg4: memref<192x128xf32, #tpu.memory_space<vmem>>, %arg5: memref<1x128xf32, #tpu.memory_space<vmem>>, %arg6: memref<128x128xf32, #tpu.memory_space<vmem>>, %arg7: memref<128x128xf32, #tpu.memory_space<vmem>>, %arg8: memref<1x128xf32, #tpu.memory_space<vmem>>, %arg9: memref<128x128xf32, #tpu.memory_space<vmem>>, %arg10: memref<1x128xf32, #tpu.memory_space<vmem>>, %arg11: memref<2x128xf32, #tpu.memory_space<vmem>>, %arg12: memref<32x64xf32, #tpu.memory_space<vmem>>, %arg13: memref<16x128xf32, #tpu.memory_space<vmem>>, %arg14: memref<8x128xf32, #tpu.memory_space<vmem>>) attributes {dimension_semantics = [#tpu.dimension_semantics<parallel>], iteration_bounds = array<i64: 1>, scalar_prefetch = 0 : i64, scratch_operands = 3 : i64, tpu.core_type = #tpu.core_type<tc>, window_params = [{transform_indices = @transform_0, window_bounds = array<i64: 32, 64>}, {pipeline_mode = #tpu.pipeline_mode<synchronous>, transform_indices = @transform_1, window_bounds = array<i64: 192, 64>}, {pipeline_mode = #tpu.pipeline_mode<synchronous>, transform_indices = @transform_2, window_bounds = array<i64: 1, 64>}, {pipeline_mode = #tpu.pipeline_mode<synchronous>, transform_indices = @transform_3, window_bounds = array<i64: 192, 128>}, {pipeline_mode = #tpu.pipeline_mode<synchronous>, transform_indices = @transform_4, window_bounds = array<i64: 1, 128>}, {pipeline_mode = #tpu.pipeline_mode<synchronous>, transform_indices = @transform_5, window_bounds = array<i64: 128, 128>}, {pipeline_mode = #tpu.pipeline_mode<synchronous>, transform_indices = @transform_6, window_bounds = array<i64: 128, 128>}, {pipeline_mode = #tpu.pipeline_mode<synchronous>, transform_indices = @transform_7, window_bounds = array<i64: 1, 128>}, {pipeline_mode = #tpu.pipeline_mode<synchronous>, transform_indices = @transform_8, window_bounds = array<i64: 128, 128>}, {pipeline_mode = #tpu.pipeline_mode<synchronous>, transform_indices = @transform_9, window_bounds = array<i64: 1, 128>}, {transform_indices = @transform_10, window_bounds = array<i64: 2, 128>}]} {
    %c0 = arith.constant 0 : index
    %c0_0 = arith.constant 0 : index
    %0 = vector.load %arg1[%c0, %c0_0] : memref<32x64xf32, #tpu.memory_space<vmem>>, vector<32x64xf32>
    %1 = tpu.iota {dimensions = array<i32: 0>} : vector<32x1xi32>
    %c16_i32 = arith.constant 16 : i32
    %c0_i32 = arith.constant 0 : i32
    %2 = arith.cmpi eq, %c16_i32, %c0_i32 : i32
    %c1_i32 = arith.constant 1 : i32
    %3 = arith.select %2, %c1_i32, %c16_i32 : i32
    %4 = vector.broadcast %3 : i32 to vector<32x1xi32>
    %5 = arith.remsi %1, %4 : vector<32x1xi32>
    %c0_i32_1 = arith.constant 0 : i32
    %6 = vector.broadcast %c0_i32_1 : i32 to vector<32x1xi32>
    %7 = arith.cmpi ne, %5, %6 : vector<32x1xi32>
    %c0_i32_2 = arith.constant 0 : i32
    %8 = vector.broadcast %c0_i32_2 : i32 to vector<32x1xi32>
    %9 = arith.cmpi slt, %5, %8 : vector<32x1xi32>
    %c0_i32_3 = arith.constant 0 : i32
    %10 = arith.cmpi slt, %3, %c0_i32_3 : i32
    %11 = vector.broadcast %10 : i1 to vector<32x1xi1>
    %12 = vector.broadcast %11 : vector<32x1xi1> to vector<32x1xi1>
    %13 = arith.xori %9, %12 : vector<32x1xi1>
    %14 = arith.andi %13, %7 : vector<32x1xi1>
    %15 = vector.broadcast %3 : i32 to vector<32x1xi32>
    %16 = arith.addi %5, %15 : vector<32x1xi32>
    %17 = arith.select %14, %16, %5 : vector<32x1xi1>, vector<32x1xi32>
    %c0_i32_4 = arith.constant 0 : i32
    %18 = vector.broadcast %c0_i32_4 : i32 to vector<32x1xi32>
    %19 = arith.cmpi eq, %17, %18 : vector<32x1xi32>
    %c1_i32_5 = arith.constant 1 : i32
    %20 = tpu.dynamic_rotate %0 by %c1_i32_5 dim 0 : vector<32x64xf32>, i32 -> vector<32x64xf32>
    %cst = arith.constant 0.000000e+00 : f32
    %21 = vector.shape_cast %19 : vector<32x1xi1> to vector<32x1xi1>
    %22 = vector.broadcast %21 : vector<32x1xi1> to vector<32x64xi1>
    %23 = vector.broadcast %cst : f32 to vector<32x64xf32>
    %24 = arith.select %22, %23, %20 : vector<32x64xi1>, vector<32x64xf32>
    %c16_i32_6 = arith.constant 16 : i32
    %c0_i32_7 = arith.constant 0 : i32
    %25 = arith.cmpi eq, %c16_i32_6, %c0_i32_7 : i32
    %c1_i32_8 = arith.constant 1 : i32
    %26 = arith.select %25, %c1_i32_8, %c16_i32_6 : i32
    %27 = vector.broadcast %26 : i32 to vector<32x1xi32>
    %28 = arith.remsi %1, %27 : vector<32x1xi32>
    %c0_i32_9 = arith.constant 0 : i32
    %29 = vector.broadcast %c0_i32_9 : i32 to vector<32x1xi32>
    %30 = arith.cmpi ne, %28, %29 : vector<32x1xi32>
    %c0_i32_10 = arith.constant 0 : i32
    %31 = vector.broadcast %c0_i32_10 : i32 to vector<32x1xi32>
    %32 = arith.cmpi slt, %28, %31 : vector<32x1xi32>
    %c0_i32_11 = arith.constant 0 : i32
    %33 = arith.cmpi slt, %26, %c0_i32_11 : i32
    %34 = vector.broadcast %33 : i1 to vector<32x1xi1>
    %35 = vector.broadcast %34 : vector<32x1xi1> to vector<32x1xi1>
    %36 = arith.xori %32, %35 : vector<32x1xi1>
    %37 = arith.andi %36, %30 : vector<32x1xi1>
    %38 = vector.broadcast %26 : i32 to vector<32x1xi32>
    %39 = arith.addi %28, %38 : vector<32x1xi32>
    %40 = arith.select %37, %39, %28 : vector<32x1xi1>, vector<32x1xi32>
    %c15_i32 = arith.constant 15 : i32
    %41 = vector.broadcast %c15_i32 : i32 to vector<32x1xi32>
    %42 = arith.cmpi eq, %40, %41 : vector<32x1xi32>
    %c31_i32 = arith.constant 31 : i32
    %43 = tpu.dynamic_rotate %0 by %c31_i32 dim 0 : vector<32x64xf32>, i32 -> vector<32x64xf32>
    %cst_12 = arith.constant 0.000000e+00 : f32
    %44 = vector.shape_cast %42 : vector<32x1xi1> to vector<32x1xi1>
    %45 = vector.broadcast %44 : vector<32x1xi1> to vector<32x64xi1>
    %46 = vector.broadcast %cst_12 : f32 to vector<32x64xf32>
    %47 = arith.select %45, %46, %43 : vector<32x64xi1>, vector<32x64xf32>
    %48 = tpu.concatenate %24, %0, %47 in 1 : vector<32x64xf32>, vector<32x64xf32>, vector<32x64xf32> -> vector<32x192xf32>
    %c0_13 = arith.constant 0 : index
    %c0_14 = arith.constant 0 : index
    %49 = vector.load %arg2[%c0_13, %c0_14] : memref<192x64xf32, #tpu.memory_space<vmem>>, vector<192x64xf32>
    %cst_15 = arith.constant dense<0.000000e+00> : vector<32x64xf32>
    %50 = tpu.matmul %48, %49, %cst_15 {dimension_numbers = #tpu.dot_dimension_numbers<[1], [0], [0], [1], [0, 0, 1, 1], [], []>} : vector<32x192xf32>, vector<192x64xf32>, vector<32x64xf32> -> vector<32x64xf32>
    %c0_16 = arith.constant 0 : index
    %c0_17 = arith.constant 0 : index
    %51 = vector.load %arg3[%c0_16, %c0_17] : memref<1x64xf32, #tpu.memory_space<vmem>>, vector<1x64xf32>
    %52 = vector.broadcast %51 : vector<1x64xf32> to vector<32x64xf32>
    %53 = arith.addf %50, %52 : vector<32x64xf32>
    %cst_18 = arith.constant 0.000000e+00 : f32
    %54 = vector.broadcast %cst_18 : f32 to vector<32x64xf32>
    %55 = arith.maximumf %53, %54 : vector<32x64xf32>
    %c0_19 = arith.constant 0 : index
    %c0_20 = arith.constant 0 : index
    %56 = vector.load %arg12[%c0_19, %c0_20] : memref<32x64xf32, #tpu.memory_space<vmem>>, vector<32x64xf32>
    tpu.vector_store %arg12[%c0_19, %c0_20], %55 {strides = array<i32>} : memref<32x64xf32, #tpu.memory_space<vmem>>, vector<32x64xf32>,
    %c0_21 = arith.constant 0 : index
    %c0_22 = arith.constant 0 : index
    %57 = tpu.strided_load %arg12[%c0_21, %c0_22] {strides = array<i32: 2, 1>} : memref<32x64xf32, #tpu.memory_space<vmem>>, vector<16x64xf32>
    %c1 = arith.constant 1 : index
    %c0_23 = arith.constant 0 : index
    %58 = tpu.strided_load %arg12[%c1, %c0_23] {strides = array<i32: 2, 1>} : memref<32x64xf32, #tpu.memory_space<vmem>>, vector<16x64xf32>
    %59 = arith.maximumf %57, %58 : vector<16x64xf32>
    %60 = tpu.iota {dimensions = array<i32: 0>} : vector<16x1xi32>
    %c8_i32 = arith.constant 8 : i32
    %c0_i32_24 = arith.constant 0 : i32
    %61 = arith.cmpi eq, %c8_i32, %c0_i32_24 : i32
    %c1_i32_25 = arith.constant 1 : i32
    %62 = arith.select %61, %c1_i32_25, %c8_i32 : i32
    %63 = vector.broadcast %62 : i32 to vector<16x1xi32>
    %64 = arith.remsi %60, %63 : vector<16x1xi32>
    %c0_i32_26 = arith.constant 0 : i32
    %65 = vector.broadcast %c0_i32_26 : i32 to vector<16x1xi32>
    %66 = arith.cmpi ne, %64, %65 : vector<16x1xi32>
    %c0_i32_27 = arith.constant 0 : i32
    %67 = vector.broadcast %c0_i32_27 : i32 to vector<16x1xi32>
    %68 = arith.cmpi slt, %64, %67 : vector<16x1xi32>
    %c0_i32_28 = arith.constant 0 : i32
    %69 = arith.cmpi slt, %62, %c0_i32_28 : i32
    %70 = vector.broadcast %69 : i1 to vector<16x1xi1>
    %71 = vector.broadcast %70 : vector<16x1xi1> to vector<16x1xi1>
    %72 = arith.xori %68, %71 : vector<16x1xi1>
    %73 = arith.andi %72, %66 : vector<16x1xi1>
    %74 = vector.broadcast %62 : i32 to vector<16x1xi32>
    %75 = arith.addi %64, %74 : vector<16x1xi32>
    %76 = arith.select %73, %75, %64 : vector<16x1xi1>, vector<16x1xi32>
    %c0_i32_29 = arith.constant 0 : i32
    %77 = vector.broadcast %c0_i32_29 : i32 to vector<16x1xi32>
    %78 = arith.cmpi eq, %76, %77 : vector<16x1xi32>
    %c1_i32_30 = arith.constant 1 : i32
    %79 = tpu.dynamic_rotate %59 by %c1_i32_30 dim 0 : vector<16x64xf32>, i32 -> vector<16x64xf32>
    %cst_31 = arith.constant 0.000000e+00 : f32
    %80 = vector.shape_cast %78 : vector<16x1xi1> to vector<16x1xi1>
    %81 = vector.broadcast %80 : vector<16x1xi1> to vector<16x64xi1>
    %82 = vector.broadcast %cst_31 : f32 to vector<16x64xf32>
    %83 = arith.select %81, %82, %79 : vector<16x64xi1>, vector<16x64xf32>
    %c8_i32_32 = arith.constant 8 : i32
    %c0_i32_33 = arith.constant 0 : i32
    %84 = arith.cmpi eq, %c8_i32_32, %c0_i32_33 : i32
    %c1_i32_34 = arith.constant 1 : i32
    %85 = arith.select %84, %c1_i32_34, %c8_i32_32 : i32
    %86 = vector.broadcast %85 : i32 to vector<16x1xi32>
    %87 = arith.remsi %60, %86 : vector<16x1xi32>
    %c0_i32_35 = arith.constant 0 : i32
    %88 = vector.broadcast %c0_i32_35 : i32 to vector<16x1xi32>
    %89 = arith.cmpi ne, %87, %88 : vector<16x1xi32>
    %c0_i32_36 = arith.constant 0 : i32
    %90 = vector.broadcast %c0_i32_36 : i32 to vector<16x1xi32>
    %91 = arith.cmpi slt, %87, %90 : vector<16x1xi32>
    %c0_i32_37 = arith.constant 0 : i32
    %92 = arith.cmpi slt, %85, %c0_i32_37 : i32
    %93 = vector.broadcast %92 : i1 to vector<16x1xi1>
    %94 = vector.broadcast %93 : vector<16x1xi1> to vector<16x1xi1>
    %95 = arith.xori %91, %94 : vector<16x1xi1>
    %96 = arith.andi %95, %89 : vector<16x1xi1>
    %97 = vector.broadcast %85 : i32 to vector<16x1xi32>
    %98 = arith.addi %87, %97 : vector<16x1xi32>
    %99 = arith.select %96, %98, %87 : vector<16x1xi1>, vector<16x1xi32>
    %c7_i32 = arith.constant 7 : i32
    %100 = vector.broadcast %c7_i32 : i32 to vector<16x1xi32>
    %101 = arith.cmpi eq, %99, %100 : vector<16x1xi32>
    %c15_i32_38 = arith.constant 15 : i32
    %102 = tpu.dynamic_rotate %59 by %c15_i32_38 dim 0 : vector<16x64xf32>, i32 -> vector<16x64xf32>
    %cst_39 = arith.constant 0.000000e+00 : f32
    %103 = vector.shape_cast %101 : vector<16x1xi1> to vector<16x1xi1>
    %104 = vector.broadcast %103 : vector<16x1xi1> to vector<16x64xi1>
    %105 = vector.broadcast %cst_39 : f32 to vector<16x64xf32>
    %106 = arith.select %104, %105, %102 : vector<16x64xi1>, vector<16x64xf32>
    %107 = tpu.concatenate %83, %59, %106 in 1 : vector<16x64xf32>, vector<16x64xf32>, vector<16x64xf32> -> vector<16x192xf32>
    %c0_40 = arith.constant 0 : index
    %c0_41 = arith.constant 0 : index
    %108 = vector.load %arg4[%c0_40, %c0_41] : memref<192x128xf32, #tpu.memory_space<vmem>>, vector<192x128xf32>
    %cst_42 = arith.constant dense<0.000000e+00> : vector<16x128xf32>
    %109 = tpu.matmul %107, %108, %cst_42 {dimension_numbers = #tpu.dot_dimension_numbers<[1], [0], [0], [1], [0, 0, 1, 1], [], []>} : vector<16x192xf32>, vector<192x128xf32>, vector<16x128xf32> -> vector<16x128xf32>
    %c0_43 = arith.constant 0 : index
    %c0_44 = arith.constant 0 : index
    %110 = vector.load %arg5[%c0_43, %c0_44] : memref<1x128xf32, #tpu.memory_space<vmem>>, vector<1x128xf32>
    %111 = vector.broadcast %110 : vector<1x128xf32> to vector<16x128xf32>
    %112 = arith.addf %109, %111 : vector<16x128xf32>
    %cst_45 = arith.constant 0.000000e+00 : f32
    %113 = vector.broadcast %cst_45 : f32 to vector<16x128xf32>
    %114 = arith.maximumf %112, %113 : vector<16x128xf32>
    %c0_46 = arith.constant 0 : index
    %c0_47 = arith.constant 0 : index
    %115 = vector.load %arg13[%c0_46, %c0_47] : memref<16x128xf32, #tpu.memory_space<vmem>>, vector<16x128xf32>
    tpu.vector_store %arg13[%c0_46, %c0_47], %114 {strides = array<i32>} : memref<16x128xf32, #tpu.memory_space<vmem>>, vector<16x128xf32>,
    %c0_48 = arith.constant 0 : index
    %c0_49 = arith.constant 0 : index
    %116 = tpu.strided_load %arg13[%c0_48, %c0_49] {strides = array<i32: 2, 1>} : memref<16x128xf32, #tpu.memory_space<vmem>>, vector<8x128xf32>
    %c1_50 = arith.constant 1 : index
    %c0_51 = arith.constant 0 : index
    %117 = tpu.strided_load %arg13[%c1_50, %c0_51] {strides = array<i32: 2, 1>} : memref<16x128xf32, #tpu.memory_space<vmem>>, vector<8x128xf32>
    %118 = arith.maximumf %116, %117 : vector<8x128xf32>
    %c0_52 = arith.constant 0 : index
    %c0_53 = arith.constant 0 : index
    %119 = vector.load %arg14[%c0_52, %c0_53] : memref<8x128xf32, #tpu.memory_space<vmem>>, vector<8x128xf32>
    tpu.vector_store %arg14[%c0_52, %c0_53], %118 {strides = array<i32>} : memref<8x128xf32, #tpu.memory_space<vmem>>, vector<8x128xf32>,
    %c0_54 = arith.constant 0 : index
    %c0_55 = arith.constant 0 : index
    %120 = tpu.strided_load %arg14[%c0_54, %c0_55] {strides = array<i32: 4, 1>} : memref<8x128xf32, #tpu.memory_space<vmem>>, vector<2x128xf32>
    %c1_56 = arith.constant 1 : index
    %c0_57 = arith.constant 0 : index
    %121 = tpu.strided_load %arg14[%c1_56, %c0_57] {strides = array<i32: 4, 1>} : memref<8x128xf32, #tpu.memory_space<vmem>>, vector<2x128xf32>
    %122 = arith.addf %120, %121 : vector<2x128xf32>
    %123 = arith.maximumf %120, %121 : vector<2x128xf32>
    %c2 = arith.constant 2 : index
    %c0_58 = arith.constant 0 : index
    %124 = tpu.strided_load %arg14[%c2, %c0_58] {strides = array<i32: 4, 1>} : memref<8x128xf32, #tpu.memory_space<vmem>>, vector<2x128xf32>
    %125 = arith.addf %122, %124 : vector<2x128xf32>
    %126 = arith.maximumf %123, %124 : vector<2x128xf32>
    %c3 = arith.constant 3 : index
    %c0_59 = arith.constant 0 : index
    %127 = tpu.strided_load %arg14[%c3, %c0_59] {strides = array<i32: 4, 1>} : memref<8x128xf32, #tpu.memory_space<vmem>>, vector<2x128xf32>
    %128 = arith.addf %125, %127 : vector<2x128xf32>
    %129 = arith.maximumf %126, %127 : vector<2x128xf32>
    %cst_60 = arith.constant 2.500000e-01 : f32
    %130 = vector.broadcast %cst_60 : f32 to vector<2x128xf32>
    %131 = arith.mulf %128, %130 : vector<2x128xf32>
    %c0_61 = arith.constant 0 : index
    %c0_62 = arith.constant 0 : index
    %132 = vector.load %arg6[%c0_61, %c0_62] : memref<128x128xf32, #tpu.memory_space<vmem>>, vector<128x128xf32>
    %cst_63 = arith.constant dense<0.000000e+00> : vector<2x128xf32>
    %133 = tpu.matmul %131, %132, %cst_63 {dimension_numbers = #tpu.dot_dimension_numbers<[1], [0], [0], [1], [0, 0, 1, 1], [], []>} : vector<2x128xf32>, vector<128x128xf32>, vector<2x128xf32> -> vector<2x128xf32>
    %c0_64 = arith.constant 0 : index
    %c0_65 = arith.constant 0 : index
    %134 = vector.load %arg7[%c0_64, %c0_65] : memref<128x128xf32, #tpu.memory_space<vmem>>, vector<128x128xf32>
    %cst_66 = arith.constant dense<0.000000e+00> : vector<2x128xf32>
    %135 = tpu.matmul %129, %134, %cst_66 {dimension_numbers = #tpu.dot_dimension_numbers<[1], [0], [0], [1], [0, 0, 1, 1], [], []>} : vector<2x128xf32>, vector<128x128xf32>, vector<2x128xf32> -> vector<2x128xf32>
    %136 = arith.addf %133, %135 : vector<2x128xf32>
    %c0_67 = arith.constant 0 : index
    %c0_68 = arith.constant 0 : index
    %137 = vector.load %arg8[%c0_67, %c0_68] : memref<1x128xf32, #tpu.memory_space<vmem>>, vector<1x128xf32>
    %138 = vector.broadcast %137 : vector<1x128xf32> to vector<2x128xf32>
    %139 = arith.addf %136, %138 : vector<2x128xf32>
    %cst_69 = arith.constant 0.000000e+00 : f32
    %140 = vector.broadcast %cst_69 : f32 to vector<2x128xf32>
    %141 = arith.maximumf %139, %140 : vector<2x128xf32>
    %c0_70 = arith.constant 0 : index
    %c0_71 = arith.constant 0 : index
    %142 = vector.load %arg9[%c0_70, %c0_71] : memref<128x128xf32, #tpu.memory_space<vmem>>, vector<128x128xf32>
    %cst_72 = arith.constant dense<0.000000e+00> : vector<2x128xf32>
    %143 = tpu.matmul %141, %142, %cst_72 {dimension_numbers = #tpu.dot_dimension_numbers<[1], [0], [0], [1], [0, 0, 1, 1], [], []>} : vector<2x128xf32>, vector<128x128xf32>, vector<2x128xf32> -> vector<2x128xf32>
    %c0_73 = arith.constant 0 : index
    %c0_74 = arith.constant 0 : index
    %144 = vector.load %arg10[%c0_73, %c0_74] : memref<1x128xf32, #tpu.memory_space<vmem>>, vector<1x128xf32>
    %145 = vector.broadcast %144 : vector<1x128xf32> to vector<2x128xf32>
    %146 = arith.addf %143, %145 : vector<2x128xf32>
    %c0_75 = arith.constant 0 : index
    %c0_76 = arith.constant 0 : index
    %147 = vector.load %arg11[%c0_75, %c0_76] : memref<2x128xf32, #tpu.memory_space<vmem>>, vector<2x128xf32>
    tpu.vector_store %arg11[%c0_75, %c0_76], %146 {strides = array<i32>} : memref<2x128xf32, #tpu.memory_space<vmem>>, vector<2x128xf32>,
    return
  }
  func.func @transform_0(%arg0: i32) -> (i32, i32) {
    %c0_i32 = arith.constant 0 : i32
    %c0_i32_0 = arith.constant 0 : i32
    return %arg0, %c0_i32 : i32, i32
  }
  func.func @transform_1(%arg0: i32) -> (i32, i32) {
    %c0_i32 = arith.constant 0 : i32
    %c0_i32_0 = arith.constant 0 : i32
    %c0_i32_1 = arith.constant 0 : i32
    return %c0_i32, %c0_i32_0 : i32, i32
  }
  func.func @transform_2(%arg0: i32) -> (i32, i32) {
    %c0_i32 = arith.constant 0 : i32
    %c0_i32_0 = arith.constant 0 : i32
    %c0_i32_1 = arith.constant 0 : i32
    return %c0_i32, %c0_i32_0 : i32, i32
  }
  func.func @transform_3(%arg0: i32) -> (i32, i32) {
    %c0_i32 = arith.constant 0 : i32
    %c0_i32_0 = arith.constant 0 : i32
    %c0_i32_1 = arith.constant 0 : i32
    return %c0_i32, %c0_i32_0 : i32, i32
  }
  func.func @transform_4(%arg0: i32) -> (i32, i32) {
    %c0_i32 = arith.constant 0 : i32
    %c0_i32_0 = arith.constant 0 : i32
    %c0_i32_1 = arith.constant 0 : i32
    return %c0_i32, %c0_i32_0 : i32, i32
  }
  func.func @transform_5(%arg0: i32) -> (i32, i32) {
    %c0_i32 = arith.constant 0 : i32
    %c0_i32_0 = arith.constant 0 : i32
    %c0_i32_1 = arith.constant 0 : i32
    return %c0_i32, %c0_i32_0 : i32, i32
  }
  func.func @transform_6(%arg0: i32) -> (i32, i32) {
    %c0_i32 = arith.constant 0 : i32
    %c0_i32_0 = arith.constant 0 : i32
    %c0_i32_1 = arith.constant 0 : i32
    return %c0_i32, %c0_i32_0 : i32, i32
  }
  func.func @transform_7(%arg0: i32) -> (i32, i32) {
    %c0_i32 = arith.constant 0 : i32
    %c0_i32_0 = arith.constant 0 : i32
    %c0_i32_1 = arith.constant 0 : i32
    return %c0_i32, %c0_i32_0 : i32, i32
  }
  func.func @transform_8(%arg0: i32) -> (i32, i32) {
    %c0_i32 = arith.constant 0 : i32
    %c0_i32_0 = arith.constant 0 : i32
    %c0_i32_1 = arith.constant 0 : i32
    return %c0_i32, %c0_i32_0 : i32, i32
  }
  func.func @transform_9(%arg0: i32) -> (i32, i32) {
    %c0_i32 = arith.constant 0 : i32
    %c0_i32_0 = arith.constant 0 : i32
    %c0_i32_1 = arith.constant 0 : i32
    return %c0_i32, %c0_i32_0 : i32, i32
  }
  func.func @transform_10(%arg0: i32) -> (i32, i32) {
    %c0_i32 = arith.constant 0 : i32
    %c0_i32_0 = arith.constant 0 : i32
    return %arg0, %c0_i32 : i32, i32
  }
}

</mosaic_0001>

<llo_original>
// kernel: tpu_custom_call.1
$region0: #{tpu_custom_call.1}
  #allocation0 [shape = 'u32[]', space=smem, size = 0x4, offset = 0x4, fixed_abs, tag = 'smem constant byte address 0x4 - core index']
  #allocation1 [shape = 'u32[144,128]{1,0:T(1,128)}', space=vmem, size = 0x12000, scoped, tag = 'internal scratch']
  #allocation2 [shape = 'f32[32,64]{1,0:T(8,128)}', space=vmem, size = 0x4000, scoped, tag = 'scratch operand']
  #allocation3 [shape = 'f32[16,128]{1,0:T(8,128)}', space=vmem, size = 0x2000, scoped, tag = 'scratch operand']
  #allocation4 [shape = 'f32[8,128]{1,0:T(8,128)}', space=vmem, size = 0x1000, scoped, tag = 'scratch operand']
  %s0 = inlined_call_operand.hbm [shape: f32[32,64], index: 0, kind: input, shape index: {}]
  %s1 = inlined_call_operand.vmem [shape: f32[192,64], index: 1, kind: input, shape index: {}]
  %s2 = inlined_call_operand.vmem [shape: f32[1,64], index: 2, kind: input, shape index: {}]
  %s3 = inlined_call_operand.vmem [shape: f32[192,128], index: 3, kind: input, shape index: {}]
  %s4 = inlined_call_operand.vmem [shape: f32[1,128], index: 4, kind: input, shape index: {}]
  %s5 = inlined_call_operand.vmem [shape: f32[128,128], index: 5, kind: input, shape index: {}]
  %s6 = inlined_call_operand.hbm [shape: f32[128,128], index: 6, kind: input, shape index: {}]
  %s7 = inlined_call_operand.vmem [shape: f32[1,128], index: 7, kind: input, shape index: {}]
  %s8 = inlined_call_operand.hbm [shape: f32[128,128], index: 8, kind: input, shape index: {}]
  %s9 = inlined_call_operand.vmem [shape: f32[1,128], index: 9, kind: input, shape index: {}]
  %s10 = inlined_call_operand.hbm [shape: f32[2,128], index: 10, kind: output, shape index: {}]
  %s11 = sld [smem:[#allocation0]]
  $region62: #{tpu_custom_call.1} parent=0
    _
  %s13 = ssub.s32 1, %s11
  %s14 = scalar_select 0, %s13, %s11
  $region1: #{tpu_custom_call.1} parent=0
    #allocation5 [shape = 'u8[16384]{0}', space=vmem, size = 0x4000, scoped, tag = 'input window, operand 0, single buffered']
    #allocation6 [shape = 's32[1]{0}', space=sflag, size = 0x4, scoped, tag = 'scoped memory for tpu_custom_call.1']
    #allocation7 [shape = 's32[1]{0}', space=sflag, size = 0x4, scoped, tag = 'scoped memory for tpu_custom_call.1']
    #allocation8 [shape = 'u8[65536]{0}', space=vmem, size = 0x10000, scoped, tag = 'input window, operand 6, single buffered']
    #allocation9 [shape = 's32[1]{0}', space=sflag, size = 0x4, scoped, tag = 'scoped memory for tpu_custom_call.1']
    #allocation10 [shape = 'u8[65536]{0}', space=vmem, size = 0x10000, scoped, tag = 'input window, operand 8, single buffered']
    #allocation11 [shape = 'u8[1024]{0}', space=vmem, size = 0x400, scoped, tag = 'output window, operand 0, single buffered']
    %15 = vsyncpa [#allocation6], 0
    %16 = vsyncpa [#allocation9], 0
    %17 = vsyncpa [#allocation7], 0
    // Predicated region
    $region2: #{tpu_custom_call.1} parent=1 // pred_check
      _
    $region3: #{tpu_custom_call.1} parent=1 // pred_check_branch
      %19 = sbr.rel (0) target = $region5
    $region4: #{tpu_custom_call.1} parent=1 // pred_region
      %s21 = ssub.s32 512, 512
      %22 = vsyncadd [#allocation6], %s21
      %s23 = sshll.u32 [#allocation5], 4
      %s24 = int_to_ptr.vmem [resolvable:$true] %s23
      %29 = dma.hbm_to_vmem [thread:$0]  %s0, 512, %s24, [#allocation6], 128, 128, 8
    $region5: #{tpu_custom_call.1} parent=1 // pred_fallthru
      _
    // Predicated region
    $region6: #{tpu_custom_call.1} parent=1 // pred_check
      _
    $region7: #{tpu_custom_call.1} parent=1 // pred_check_branch
      %31 = sbr.rel (0) target = $region9
    $region8: #{tpu_custom_call.1} parent=1 // pred_region
      _
    $region9: #{tpu_custom_call.1} parent=1 // pred_fallthru
      _
    // Predicated region
    $region10: #{tpu_custom_call.1} parent=1 // pred_check
      _
    $region11: #{tpu_custom_call.1} parent=1 // pred_check_branch
      %33 = sbr.rel (0) target = $region13
    $region12: #{tpu_custom_call.1} parent=1 // pred_region
      _
    $region13: #{tpu_custom_call.1} parent=1 // pred_fallthru
      _
    // Predicated region
    $region14: #{tpu_custom_call.1} parent=1 // pred_check
      _
    $region15: #{tpu_custom_call.1} parent=1 // pred_check_branch
      %35 = sbr.rel (0) target = $region17
    $region16: #{tpu_custom_call.1} parent=1 // pred_region
      _
    $region17: #{tpu_custom_call.1} parent=1 // pred_fallthru
      _
    // Predicated region
    $region18: #{tpu_custom_call.1} parent=1 // pred_check
      _
    $region19: #{tpu_custom_call.1} parent=1 // pred_check_branch
      %37 = sbr.rel (0) target = $region21
    $region20: #{tpu_custom_call.1} parent=1 // pred_region
      _
    $region21: #{tpu_custom_call.1} parent=1 // pred_fallthru
      _
    // Predicated region
    $region22: #{tpu_custom_call.1} parent=1 // pred_check
      _
    $region23: #{tpu_custom_call.1} parent=1 // pred_check_branch
      %39 = sbr.rel (0) target = $region25
    $region24: #{tpu_custom_call.1} parent=1 // pred_region
      _
    $region25: #{tpu_custom_call.1} parent=1 // pred_fallthru
      _
    // Predicated region
    $region26: #{tpu_custom_call.1} parent=1 // pred_check
      _
    $region27: #{tpu_custom_call.1} parent=1 // pred_check_branch
      %41 = sbr.rel (0) target = $region29
    $region28: #{tpu_custom_call.1} parent=1 // pred_region
      %s43 = ssub.s32 2048, 2048
      %44 = vsyncadd [#allocation9], %s43
      %s45 = sshll.u32 [#allocation8], 4
      %s46 = int_to_ptr.vmem [resolvable:$true] %s45
      %51 = dma.hbm_to_vmem [thread:$0]  %s6, 2048, %s46, [#allocation9], 128, 128, 8
    $region29: #{tpu_custom_call.1} parent=1 // pred_fallthru
      _
    // Predicated region
    $region30: #{tpu_custom_call.1} parent=1 // pred_check
      _
    $region31: #{tpu_custom_call.1} parent=1 // pred_check_branch
      %53 = sbr.rel (0) target = $region33
    $region32: #{tpu_custom_call.1} parent=1 // pred_region
      _
    $region33: #{tpu_custom_call.1} parent=1 // pred_fallthru
      _
    // Predicated region
    $region34: #{tpu_custom_call.1} parent=1 // pred_check
      _
    $region35: #{tpu_custom_call.1} parent=1 // pred_check_branch
      %55 = sbr.rel (0) target = $region37
    $region36: #{tpu_custom_call.1} parent=1 // pred_region
      %s57 = ssub.s32 2048, 2048
      %58 = vsyncadd [#allocation9], %s57
      %s59 = sshll.u32 [#allocation10], 4
      %s60 = int_to_ptr.vmem [resolvable:$true] %s59
      %65 = dma.hbm_to_vmem [thread:$0]  %s8, 2048, %s60, [#allocation9], 128, 128, 8
    $region37: #{tpu_custom_call.1} parent=1 // pred_fallthru
      _
    // Predicated region
    $region38: #{tpu_custom_call.1} parent=1 // pred_check
      _
    $region39: #{tpu_custom_call.1} parent=1 // pred_check_branch
      %67 = sbr.rel (0) target = $region41
    $region40: #{tpu_custom_call.1} parent=1 // pred_region
      _
    $region41: #{tpu_custom_call.1} parent=1 // pred_fallthru
      _
    // Predicated region
    $region42: #{tpu_custom_call.1} parent=1 // pred_check
      _
    $region43: #{tpu_custom_call.1} parent=1 // pred_check_branch
      %69 = sbr.rel (0) target = $region45
    $region44: #{tpu_custom_call.1} parent=1 // pred_region
      %70 = dma.done [#allocation6], 512
    $region45: #{tpu_custom_call.1} parent=1 // pred_fallthru
      _
    // Predicated region
    $region46: #{tpu_custom_call.1} parent=1 // pred_check
      _
    $region47: #{tpu_custom_call.1} parent=1 // pred_check_branch
      %72 = sbr.rel (0) target = $region49
    $region48: #{tpu_custom_call.1} parent=1 // pred_region
      %73 = dma.done [#allocation9], 2048
    $region49: #{tpu_custom_call.1} parent=1 // pred_fallthru
      _
    // Predicated region
    $region50: #{tpu_custom_call.1} parent=1 // pred_check
      _
    $region51: #{tpu_custom_call.1} parent=1 // pred_check_branch
      %75 = sbr.rel (0) target = $region53
    $region52: #{tpu_custom_call.1} parent=1 // pred_region
      %76 = dma.done [#allocation9], 2048
    $region53: #{tpu_custom_call.1} parent=1 // pred_fallthru
      _
    %v77 = vld [vmem:[#allocation5] sm:$0xff]
    %v78 = vld [vmem:[#allocation5 + $0x8] sm:$0xff]
    %v79 = vld [vmem:[#allocation5 + $0x10] sm:$0xff]
    %v80 = vld [vmem:[#allocation5 + $0x18] sm:$0xff]
    %v81 = vlaneseq
    %v82 = vshrl.u32 %v81, 7
    %v83 = vadd.s32 %v82, 8
    %v84 = vadd.s32 %v82, 16
    %v85 = vadd.s32 %v82, 24
    %vm86 = vcmp.lt.s32.totalorder %v82, 0
    %v87 = vsub.s32 0, %v82
    %v88 = vsel %vm86, %v87, %v82
    %v89 = vshrl.u32 %v88, 4
    %v90 = vand.u32 %v88, 15
    %v91 = vsub.s32 0, %v90
    %v92 = vsel %vm86, %v91, %v90
    %vm93 = vcmp.lt.s32.totalorder %v83, 0
    %v94 = vsub.s32 0, %v83
    %v95 = vsel %vm93, %v94, %v83
    %v96 = vshrl.u32 %v95, 4
    %v97 = vand.u32 %v95, 15
    %v98 = vsub.s32 0, %v97
    %v99 = vsel %vm93, %v98, %v97
    %vm100 = vcmp.lt.s32.totalorder %v84, 0
    %v101 = vsub.s32 0, %v84
    %v102 = vsel %vm100, %v101, %v84
    %v103 = vshrl.u32 %v102, 4
    %v104 = vand.u32 %v102, 15
    %v105 = vsub.s32 0, %v104
    %v106 = vsel %vm100, %v105, %v104
    %vm107 = vcmp.lt.s32.totalorder %v85, 0
    %v108 = vsub.s32 0, %v85
    %v109 = vsel %vm107, %v108, %v85
    %v110 = vshrl.u32 %v109, 4
    %v111 = vand.u32 %v109, 15
    %v112 = vsub.s32 0, %v111
    %v113 = vsel %vm107, %v112, %v111
    %vm114 = vcmp.ne.s32.totalorder %v92, 0
    %vm115 = vcmp.ne.s32.totalorder %v99, 0
    %vm116 = vcmp.ne.s32.totalorder %v106, 0
    %vm117 = vcmp.ne.s32.totalorder %v113, 0
    %vm118 = vcmp.lt.s32.totalorder %v92, 0
    %vm119 = vcmp.lt.s32.totalorder %v99, 0
    %vm120 = vcmp.lt.s32.totalorder %v106, 0
    %vm121 = vcmp.lt.s32.totalorder %v113, 0
    %vm122 = vmand %vm118, %vm114
    %vm123 = vmand %vm119, %vm115
    %vm124 = vmand %vm120, %vm116
    %vm125 = vmand %vm121, %vm117
    %v126 = vadd.s32 %v92, 16
    %v127 = vadd.s32 %v99, 16
    %v128 = vadd.s32 %v106, 16
    %v129 = vadd.s32 %v113, 16
    %v130 = vsel %vm122, %v126, %v92
    %v131 = vsel %vm123, %v127, %v99
    %v132 = vsel %vm124, %v128, %v106
    %v133 = vsel %vm125, %v129, %v113
    %vm134 = vcmp.eq.s32.totalorder %v130, 0
    %vm135 = vcmp.eq.s32.totalorder %v131, 0
    %vm136 = vcmp.eq.s32.totalorder %v132, 0
    %vm137 = vcmp.eq.s32.totalorder %v133, 0
    %v138 = vrot.slane %v77, 7
    %v139 = vrot.slane %v78, 7
    %v140 = vrot.slane %v79, 7
    %v141 = vrot.slane %v80, 7
    %vm142 = vcmp.lt.s32.totalorder %v82, 1
    %v143 = vsel %vm142, %v140, %v141
    %v144 = vsel %vm142, %v139, %v140
    %v145 = vsel %vm142, %v138, %v139
    %v146 = vsel %vm142, %v141, %v138
    %v147 = vsel %vm134, 1, 0
    %v148 = vsel %vm135, 1, 0
    %v149 = vsel %vm136, 1, 0
    %v150 = vsel %vm137, 1, 0
    %vm151 = vcmp.eq.s32.totalorder %v147, 1
    %vm152 = vcmp.eq.s32.totalorder %v148, 1
    %vm153 = vcmp.eq.s32.totalorder %v149, 1
    %vm154 = vcmp.eq.s32.totalorder %v150, 1
    %v155 = vsel %vm151, 0.0, %v146
    %v156 = vsel %vm152, 0.0, %v145
    %v157 = vsel %vm153, 0.0, %v144
    %v158 = vsel %vm154, 0.0, %v143
    %vm159 = vcmp.eq.s32.totalorder %v130, 15
    %vm160 = vcmp.eq.s32.totalorder %v131, 15
    %vm161 = vcmp.eq.s32.totalorder %v132, 15
    %vm162 = vcmp.eq.s32.totalorder %v133, 15
    %v163 = vrot.slane %v77, 1
    %v164 = vrot.slane %v78, 1
    %v165 = vrot.slane %v79, 1
    %v166 = vrot.slane %v80, 1
    %vm167 = vcmp.lt.s32.totalorder %v82, 7
    %v168 = vsel %vm167, %v165, %v166
    %v169 = vsel %vm167, %v164, %v165
    %v170 = vsel %vm167, %v163, %v164
    %v171 = vsel %vm167, %v166, %v163
    %v172 = vsel %vm159, 1, 0
    %v173 = vsel %vm160, 1, 0
    %v174 = vsel %vm161, 1, 0
    %v175 = vsel %vm162, 1, 0
    %vm176 = vcmp.eq.s32.totalorder %v172, 1
    %vm177 = vcmp.eq.s32.totalorder %v173, 1
    %vm178 = vcmp.eq.s32.totalorder %v174, 1
    %vm179 = vcmp.eq.s32.totalorder %v175, 1
    %v180 = vsel %vm176, 0.0, %v170
    %v181 = vsel %vm177, 0.0, %v169
    %v182 = vsel %vm178, 0.0, %v168
    %v183 = vsel %vm179, 0.0, %v171
    %188 = vrot.lane.b32.xlu0 %v77, 64
    %v189 = vpop.permute.xlu0 %188
    %190 = vrot.lane.b32.xlu0 %v78, 64
    %v191 = vpop.permute.xlu0 %190
    %192 = vrot.lane.b32.xlu0 %v79, 64
    %v193 = vpop.permute.xlu0 %192
    %194 = vrot.lane.b32.xlu0 %v80, 64
    %v195 = vpop.permute.xlu0 %194
    %vm200 = vcmask 523264
    %v201 = vsel %vm200, %v155, %v189
    %v202 = vsel %vm200, %v156, %v191
    %v203 = vsel %vm200, %v157, %v193
    %v204 = vsel %vm200, %v158, %v195
    %v205 = vld [vmem:[%s1] sm:$0xff]
    %v206 = vld [vmem:[%s1 + $0x8] sm:$0xff]
    %v207 = vld [vmem:[%s1 + $0x10] sm:$0xff]
    %v208 = vld [vmem:[%s1 + $0x18] sm:$0xff]
    %v209 = vld [vmem:[%s1 + $0x20] sm:$0xff]
    %v210 = vld [vmem:[%s1 + $0x28] sm:$0xff]
    %v211 = vld [vmem:[%s1 + $0x30] sm:$0xff]
    %v212 = vld [vmem:[%s1 + $0x38] sm:$0xff]
    %v213 = vld [vmem:[%s1 + $0x40] sm:$0xff]
    %v214 = vld [vmem:[%s1 + $0x48] sm:$0xff]
    %v215 = vld [vmem:[%s1 + $0x50] sm:$0xff]
    %v216 = vld [vmem:[%s1 + $0x58] sm:$0xff]
    %v217 = vld [vmem:[%s1 + $0x60] sm:$0xff]
    %v218 = vld [vmem:[%s1 + $0x68] sm:$0xff]
    %v219 = vld [vmem:[%s1 + $0x70] sm:$0xff]
    %v220 = vld [vmem:[%s1 + $0x78] sm:$0xff]
    %v221 = vld [vmem:[%s1 + $0x80] sm:$0xff]
    %v222 = vld [vmem:[%s1 + $0x88] sm:$0xff]
    %v223 = vld [vmem:[%s1 + $0x90] sm:$0xff]
    %v224 = vld [vmem:[%s1 + $0x98] sm:$0xff]
    %v225 = vld [vmem:[%s1 + $0xa0] sm:$0xff]
    %v226 = vld [vmem:[%s1 + $0xa8] sm:$0xff]
    %v227 = vld [vmem:[%s1 + $0xb0] sm:$0xff]
    %v228 = vld [vmem:[%s1 + $0xb8] sm:$0xff]
    %v229 = vld [vmem:[%s2] sm:$0x1]
    %v231 = vlaneseq
    %v232 = vshrl.u32 %v231, 7
    %v233 = vsub.s32 0, %v232
    %v234 = vrot.slane %v229, %v233
    %v237 = vsel %vm200, %v180, 0
    %v240 = vsel %vm200, %v181, 0
    %v243 = vsel %vm200, %v182, 0
    %v246 = vsel %vm200, %v183, 0
    %248 = vmatprep.subr.mxu0 0.0
    %249 = vmatpush1.msra.mxu0 %v220
    %250 = vmatprep.subr.mxu0 0.0
    %251 = vmatpush1.msra.mxu0 %v219
    %252 = vmatprep.subr.mxu0 0.0
    %253 = vmatpush1.msra.mxu0 %v218
    %254 = vmatprep.subr.mxu0 0.0
    %255 = vmatpush1.msra.mxu0 %v217
    %256 = vmatprep.subr.mxu0 0.0
    %257 = vmatpush1.msra.mxu0 %v216
    %258 = vmatprep.subr.mxu0 0.0
    %259 = vmatpush1.msra.mxu0 %v215
    %260 = vmatprep.subr.mxu0 0.0
    %261 = vmatpush1.msra.mxu0 %v214
    %262 = vmatprep.subr.mxu0 0.0
    %263 = vmatpush1.msra.mxu0 %v213
    %264 = vmatprep.subr.mxu0 0.0
    %265 = vmatpush1.msra.mxu0 %v212
    %266 = vmatprep.subr.mxu0 0.0
    %267 = vmatpush1.msra.mxu0 %v211
    %268 = vmatprep.subr.mxu0 0.0
    %269 = vmatpush1.msra.mxu0 %v210
    %270 = vmatprep.subr.mxu0 0.0
    %271 = vmatpush1.msra.mxu0 %v209
    %272 = vmatprep.subr.mxu0 0.0
    %273 = vmatpush1.msra.mxu0 %v208
    %274 = vmatprep.subr.mxu0 0.0
    %275 = vmatpush1.msra.mxu0 %v207
    %276 = vmatprep.subr.mxu0 0.0
    %277 = vmatpush1.msra.mxu0 %v206
    %278 = vmatprep.subr.mxu0 0.0
    %279 = vmatpush1.msra.mxu0 %v205
    %280 = vmatprep.subr.mxu0 0.0
    %281 = vmatpush2.msra.mxu0 0.0
    %282 = vmatprep.subr.mxu0 0.0
    %283 = vmatpush2.msra.mxu0 0.0
    %284 = vmatprep.subr.mxu0 0.0
    %285 = vmatpush2.msra.mxu0 0.0
    %286 = vmatprep.subr.mxu0 0.0
    %287 = vmatpush2.msra.mxu0 0.0
    %288 = vmatprep.subr.mxu0 0.0
    %289 = vmatpush2.msra.mxu0 0.0
    %290 = vmatprep.subr.mxu0 0.0
    %291 = vmatpush2.msra.mxu0 0.0
    %292 = vmatprep.subr.mxu0 0.0
    %293 = vmatpush2.msra.mxu0 0.0
    %294 = vmatprep.subr.mxu0 0.0
    %295 = vmatpush2.msra.mxu0 0.0
    %296 = vmatprep.subr.mxu0 0.0
    %297 = vmatpush2.msra.mxu0 %v228
    %298 = vmatprep.subr.mxu0 0.0
    %299 = vmatpush2.msra.mxu0 %v227
    %300 = vmatprep.subr.mxu0 0.0
    %301 = vmatpush2.msra.mxu0 %v226
    %302 = vmatprep.subr.mxu0 0.0
    %303 = vmatpush2.msra.mxu0 %v225
    %304 = vmatprep.subr.mxu0 0.0
    %305 = vmatpush2.msra.mxu0 %v224
    %306 = vmatprep.subr.mxu0 0.0
    %307 = vmatpush2.msra.mxu0 %v223
    %308 = vmatprep.subr.mxu0 0.0
    %309 = vmatpush2.msra.mxu0 %v222
    %310 = vmatprep.subr.mxu0 0.0
    %311 = vmatpush2.msra.mxu0 %v221
    %312 = vmatprep.mubr.f32.mxu0 %v237
    %313 = vmatmul.mubr.f32.gmra.mxu0 %v201
    %v314 = vpop.f32.mrf.mxu0
    %v315 = vadd.f32 %v234, %v314
    %v316 = vpop.f32.mrf.mxu0
    %317 = vmatprep.mubr.f32.mxu0 %v240
    %318 = vmatmul.mubr.f32.gmra.mxu0 %v202
    %v319 = vpop.f32.mrf.mxu0
    %v320 = vadd.f32 %v234, %v319
    %v321 = vpop.f32.mrf.mxu0
    %322 = vmatprep.mubr.f32.mxu0 %v243
    %323 = vmatmul.mubr.f32.gmra.mxu0 %v203
    %v324 = vpop.f32.mrf.mxu0
    %v325 = vadd.f32 %v234, %v324
    %v326 = vpop.f32.mrf.mxu0
    %327 = vmatprep.mubr.f32.mxu0 %v246
    %328 = vmatmul.mubr.f32.gmra.mxu0 %v204
    %v329 = vpop.f32.mrf.mxu0
    %v330 = vadd.f32 %v234, %v329
    %v331 = vpop.f32.mrf.mxu0
    %332 = vdwg.mxu0
    %v333 = vmax.f32 %v315, 0.0
    %v334 = vmax.f32 %v320, 0.0
    %v335 = vmax.f32 %v325, 0.0
    %v336 = vmax.f32 %v330, 0.0
    %337 = vst.msk [vmem:[#allocation2] sm:$0xff] %vm200, %v333
    %338 = vst.msk [vmem:[#allocation2 + $0x8] sm:$0xff] %vm200, %v334
    %339 = vst.msk [vmem:[#allocation2 + $0x10] sm:$0xff] %vm200, %v335
    %340 = vst.msk [vmem:[#allocation2 + $0x18] sm:$0xff] %vm200, %v336
    %v341 = vld [vmem:[#allocation2] ss:$2 sm:$0xff]
    %s342 = scalar_lea.vmem [#allocation2], 16
    %v343 = vld [vmem:[%s342] ss:$2 sm:$0xff]
    %s344 = scalar_lea.vmem [#allocation2], 1
    %v345 = vld [vmem:[%s344] ss:$2 sm:$0xff]
    %s346 = scalar_lea.vmem [#allocation2], 17
    %v347 = vld [vmem:[%s346] ss:$2 sm:$0xff]
    %v348 = vmax.f32 %v341, %v345
    %v349 = vmax.f32 %v343, %v347
    %vm350 = vcmp.lt.s32.totalorder %v82, 0
    %v351 = vsub.s32 0, %v82
    %v352 = vsel %vm350, %v351, %v82
    %v353 = vshrl.u32 %v352, 3
    %v354 = vand.u32 %v352, 7
    %v355 = vsub.s32 0, %v354
    %v356 = vsel %vm350, %v355, %v354
    %vm357 = vcmp.lt.s32.totalorder %v83, 0
    %v358 = vsub.s32 0, %v83
    %v359 = vsel %vm357, %v358, %v83
    %v360 = vshrl.u32 %v359, 3
    %v361 = vand.u32 %v359, 7
    %v362 = vsub.s32 0, %v361
    %v363 = vsel %vm357, %v362, %v361
    %vm364 = vcmp.ne.s32.totalorder %v356, 0
    %vm365 = vcmp.ne.s32.totalorder %v363, 0
    %vm366 = vcmp.lt.s32.totalorder %v356, 0
    %vm367 = vcmp.lt.s32.totalorder %v363, 0
    %vm368 = vmand %vm366, %vm364
    %vm369 = vmand %vm367, %vm365
    %v370 = vadd.s32 %v356, 8
    %v371 = vadd.s32 %v363, 8
    %v372 = vsel %vm368, %v370, %v356
    %v373 = vsel %vm369, %v371, %v363
    %vm374 = vcmp.eq.s32.totalorder %v372, 0
    %vm375 = vcmp.eq.s32.totalorder %v373, 0
    %v376 = vrot.slane %v348, 7
    %v377 = vrot.slane %v349, 7
    %v378 = vsel %vm142, %v376, %v377
    %v379 = vsel %vm142, %v377, %v376
    %v380 = vsel %vm374, 1, 0
    %v381 = vsel %vm375, 1, 0
    %vm382 = vcmp.eq.s32.totalorder %v380, 1
    %vm383 = vcmp.eq.s32.totalorder %v381, 1
    %v384 = vsel %vm382, 0.0, %v379
    %v385 = vsel %vm383, 0.0, %v378
    %vm386 = vcmp.eq.s32.totalorder %v372, 7
    %vm387 = vcmp.eq.s32.totalorder %v373, 7
    %v388 = vrot.slane %v348, 1
    %v389 = vrot.slane %v349, 1
    %v390 = vsel %vm167, %v388, %v389
    %v391 = vsel %vm167, %v389, %v388
    %v392 = vsel %vm386, 1, 0
    %v393 = vsel %vm387, 1, 0
    %vm394 = vcmp.eq.s32.totalorder %v392, 1
    %vm395 = vcmp.eq.s32.totalorder %v393, 1
    %v396 = vsel %vm394, 0.0, %v390
    %v397 = vsel %vm395, 0.0, %v391
    %400 = vrot.lane.b32.xlu0 %v348, 64
    %v401 = vpop.permute.xlu0 %400
    %402 = vrot.lane.b32.xlu0 %v349, 64
    %v403 = vpop.permute.xlu0 %402
    %v406 = vsel %vm200, %v384, %v401
    %v407 = vsel %vm200, %v385, %v403
    %v408 = vld [vmem:[%s3] sm:$0xff]
    %v409 = vld [vmem:[%s3 + $0x8] sm:$0xff]
    %v410 = vld [vmem:[%s3 + $0x10] sm:$0xff]
    %v411 = vld [vmem:[%s3 + $0x18] sm:$0xff]
    %v412 = vld [vmem:[%s3 + $0x20] sm:$0xff]
    %v413 = vld [vmem:[%s3 + $0x28] sm:$0xff]
    %v414 = vld [vmem:[%s3 + $0x30] sm:$0xff]
    %v415 = vld [vmem:[%s3 + $0x38] sm:$0xff]
    %v416 = vld [vmem:[%s3 + $0x40] sm:$0xff]
    %v417 = vld [vmem:[%s3 + $0x48] sm:$0xff]
    %v418 = vld [vmem:[%s3 + $0x50] sm:$0xff]
    %v419 = vld [vmem:[%s3 + $0x58] sm:$0xff]
    %v420 = vld [vmem:[%s3 + $0x60] sm:$0xff]
    %v421 = vld [vmem:[%s3 + $0x68] sm:$0xff]
    %v422 = vld [vmem:[%s3 + $0x70] sm:$0xff]
    %v423 = vld [vmem:[%s3 + $0x78] sm:$0xff]
    %v424 = vld [vmem:[%s3 + $0x80] sm:$0xff]
    %v425 = vld [vmem:[%s3 + $0x88] sm:$0xff]
    %v426 = vld [vmem:[%s3 + $0x90] sm:$0xff]
    %v427 = vld [vmem:[%s3 + $0x98] sm:$0xff]
    %v428 = vld [vmem:[%s3 + $0xa0] sm:$0xff]
    %v429 = vld [vmem:[%s3 + $0xa8] sm:$0xff]
    %v430 = vld [vmem:[%s3 + $0xb0] sm:$0xff]
    %v431 = vld [vmem:[%s3 + $0xb8] sm:$0xff]
    %v432 = vld [vmem:[%s4] sm:$0x1]
    %v434 = vlaneseq
    %v435 = vshrl.u32 %v434, 7
    %v436 = vsub.s32 0, %v435
    %v437 = vrot.slane %v432, %v436
    %v440 = vsel %vm200, %v396, 0
    %v443 = vsel %vm200, %v397, 0
    %445 = vmatprep.subr.mxu0 0.0
    %446 = vmatpush1.msra.mxu0 %v423
    %447 = vmatprep.subr.mxu0 0.0
    %448 = vmatpush1.msra.mxu0 %v422
    %449 = vmatprep.subr.mxu0 0.0
    %450 = vmatpush1.msra.mxu0 %v421
    %451 = vmatprep.subr.mxu0 0.0
    %452 = vmatpush1.msra.mxu0 %v420
    %453 = vmatprep.subr.mxu0 0.0
    %454 = vmatpush1.msra.mxu0 %v419
    %455 = vmatprep.subr.mxu0 0.0
    %456 = vmatpush1.msra.mxu0 %v418
    %457 = vmatprep.subr.mxu0 0.0
    %458 = vmatpush1.msra.mxu0 %v417
    %459 = vmatprep.subr.mxu0 0.0
    %460 = vmatpush1.msra.mxu0 %v416
    %461 = vmatprep.subr.mxu0 0.0
    %462 = vmatpush1.msra.mxu0 %v415
    %463 = vmatprep.subr.mxu0 0.0
    %464 = vmatpush1.msra.mxu0 %v414
    %465 = vmatprep.subr.mxu0 0.0
    %466 = vmatpush1.msra.mxu0 %v413
    %467 = vmatprep.subr.mxu0 0.0
    %468 = vmatpush1.msra.mxu0 %v412
    %469 = vmatprep.subr.mxu0 0.0
    %470 = vmatpush1.msra.mxu0 %v411
    %471 = vmatprep.subr.mxu0 0.0
    %472 = vmatpush1.msra.mxu0 %v410
    %473 = vmatprep.subr.mxu0 0.0
    %474 = vmatpush1.msra.mxu0 %v409
    %475 = vmatprep.subr.mxu0 0.0
    %476 = vmatpush1.msra.mxu0 %v408
    %477 = vmatprep.subr.mxu0 0.0
    %478 = vmatpush2.msra.mxu0 0.0
    %479 = vmatprep.subr.mxu0 0.0
    %480 = vmatpush2.msra.mxu0 0.0
    %481 = vmatprep.subr.mxu0 0.0
    %482 = vmatpush2.msra.mxu0 0.0
    %483 = vmatprep.subr.mxu0 0.0
    %484 = vmatpush2.msra.mxu0 0.0
    %485 = vmatprep.subr.mxu0 0.0
    %486 = vmatpush2.msra.mxu0 0.0
    %487 = vmatprep.subr.mxu0 0.0
    %488 = vmatpush2.msra.mxu0 0.0
    %489 = vmatprep.subr.mxu0 0.0
    %490 = vmatpush2.msra.mxu0 0.0
    %491 = vmatprep.subr.mxu0 0.0
    %492 = vmatpush2.msra.mxu0 0.0
    %493 = vmatprep.subr.mxu0 0.0
    %494 = vmatpush2.msra.mxu0 %v431
    %495 = vmatprep.subr.mxu0 0.0
    %496 = vmatpush2.msra.mxu0 %v430
    %497 = vmatprep.subr.mxu0 0.0
    %498 = vmatpush2.msra.mxu0 %v429
    %499 = vmatprep.subr.mxu0 0.0
    %500 = vmatpush2.msra.mxu0 %v428
    %501 = vmatprep.subr.mxu0 0.0
    %502 = vmatpush2.msra.mxu0 %v427
    %503 = vmatprep.subr.mxu0 0.0
    %504 = vmatpush2.msra.mxu0 %v426
    %505 = vmatprep.subr.mxu0 0.0
    %506 = vmatpush2.msra.mxu0 %v425
    %507 = vmatprep.subr.mxu0 0.0
    %508 = vmatpush2.msra.mxu0 %v424
    %509 = vmatprep.mubr.f32.mxu0 %v440
    %510 = vmatmul.mubr.f32.gmra.mxu0 %v406
    %v511 = vpop.f32.mrf.mxu0
    %v512 = vadd.f32 %v437, %v511
    %v513 = vpop.f32.mrf.mxu0
    %514 = vmatprep.mubr.f32.mxu0 %v443
    %515 = vmatmul.mubr.f32.gmra.mxu0 %v407
    %v516 = vpop.f32.mrf.mxu0
    %v517 = vadd.f32 %v437, %v516
    %v518 = vpop.f32.mrf.mxu0
    %519 = vdwg.mxu0
    %v520 = vmax.f32 %v512, 0.0
    %v521 = vmax.f32 %v517, 0.0
    %522 = vst [vmem:[#allocation3] sm:$0xff] %v520
    %523 = vst [vmem:[#allocation3 + $0x8] sm:$0xff] %v521
    %v524 = vld [vmem:[#allocation3] ss:$2 sm:$0xff]
    %s525 = scalar_lea.vmem [#allocation3], 1
    %v526 = vld [vmem:[%s525] ss:$2 sm:$0xff]
    %v527 = vmax.f32 %v524, %v526
    %528 = vst [vmem:[#allocation4] sm:$0xff] %v527
    %v529 = vld [vmem:[#allocation4] ss:$4 sm:$0x3]
    %s530 = scalar_lea.vmem [#allocation4], 1
    %v531 = vld [vmem:[%s530] ss:$4 sm:$0x3]
    %v532 = vadd.f32 %v529, %v531
    %v533 = vmax.f32 %v529, %v531
    %s534 = scalar_lea.vmem [#allocation4], 2
    %v535 = vld [vmem:[%s534] ss:$4 sm:$0x3]
    %v536 = vadd.f32 %v532, %v535
    %v537 = vmax.f32 %v533, %v535
    %s538 = scalar_lea.vmem [#allocation4], 3
    %v539 = vld [vmem:[%s538] ss:$4 sm:$0x3]
    %v540 = vadd.f32 %v536, %v539
    %v541 = vmax.f32 %v537, %v539
    %v542 = vmul.f32 %v540, 0.25
    %v543 = vld [vmem:[%s5] sm:$0xff]
    %v544 = vld [vmem:[%s5 + $0x8] sm:$0xff]
    %v545 = vld [vmem:[%s5 + $0x10] sm:$0xff]
    %v546 = vld [vmem:[%s5 + $0x18] sm:$0xff]
    %v547 = vld [vmem:[%s5 + $0x20] sm:$0xff]
    %v548 = vld [vmem:[%s5 + $0x28] sm:$0xff]
    %v549 = vld [vmem:[%s5 + $0x30] sm:$0xff]
    %v550 = vld [vmem:[%s5 + $0x38] sm:$0xff]
    %v551 = vld [vmem:[%s5 + $0x40] sm:$0xff]
    %v552 = vld [vmem:[%s5 + $0x48] sm:$0xff]
    %v553 = vld [vmem:[%s5 + $0x50] sm:$0xff]
    %v554 = vld [vmem:[%s5 + $0x58] sm:$0xff]
    %v555 = vld [vmem:[%s5 + $0x60] sm:$0xff]
    %v556 = vld [vmem:[%s5 + $0x68] sm:$0xff]
    %v557 = vld [vmem:[%s5 + $0x70] sm:$0xff]
    %v558 = vld [vmem:[%s5 + $0x78] sm:$0xff]
    %v559 = vld [vmem:[#allocation8] sm:$0xff]
    %v560 = vld [vmem:[#allocation8 + $0x8] sm:$0xff]
    %v561 = vld [vmem:[#allocation8 + $0x10] sm:$0xff]
    %v562 = vld [vmem:[#allocation8 + $0x18] sm:$0xff]
    %v563 = vld [vmem:[#allocation8 + $0x20] sm:$0xff]
    %v564 = vld [vmem:[#allocation8 + $0x28] sm:$0xff]
    %v565 = vld [vmem:[#allocation8 + $0x30] sm:$0xff]
    %v566 = vld [vmem:[#allocation8 + $0x38] sm:$0xff]
    %v567 = vld [vmem:[#allocation8 + $0x40] sm:$0xff]
    %v568 = vld [vmem:[#allocation8 + $0x48] sm:$0xff]
    %v569 = vld [vmem:[#allocation8 + $0x50] sm:$0xff]
    %v570 = vld [vmem:[#allocation8 + $0x58] sm:$0xff]
    %v571 = vld [vmem:[#allocation8 + $0x60] sm:$0xff]
    %v572 = vld [vmem:[#allocation8 + $0x68] sm:$0xff]
    %v573 = vld [vmem:[#allocation8 + $0x70] sm:$0xff]
    %v574 = vld [vmem:[#allocation8 + $0x78] sm:$0xff]
    %575 = vmatprep.subr.mxu0 0.0
    %576 = vmatpush1.msra.mxu0 %v574
    %577 = vmatprep.subr.mxu0 0.0
    %578 = vmatpush1.msra.mxu0 %v573
    %579 = vmatprep.subr.mxu0 0.0
    %580 = vmatpush1.msra.mxu0 %v572
    %581 = vmatprep.subr.mxu0 0.0
    %582 = vmatpush1.msra.mxu0 %v571
    %583 = vmatprep.subr.mxu0 0.0
    %584 = vmatpush1.msra.mxu0 %v570
    %585 = vmatprep.subr.mxu0 0.0
    %586 = vmatpush1.msra.mxu0 %v569
    %587 = vmatprep.subr.mxu0 0.0
    %588 = vmatpush1.msra.mxu0 %v568
    %589 = vmatprep.subr.mxu0 0.0
    %590 = vmatpush1.msra.mxu0 %v567
    %591 = vmatprep.subr.mxu0 0.0
    %592 = vmatpush1.msra.mxu0 %v566
    %593 = vmatprep.subr.mxu0 0.0
    %594 = vmatpush1.msra.mxu0 %v565
    %595 = vmatprep.subr.mxu0 0.0
    %596 = vmatpush1.msra.mxu0 %v564
    %597 = vmatprep.subr.mxu0 0.0
    %598 = vmatpush1.msra.mxu0 %v563
    %599 = vmatprep.subr.mxu0 0.0
    %600 = vmatpush1.msra.mxu0 %v562
    %601 = vmatprep.subr.mxu0 0.0
    %602 = vmatpush1.msra.mxu0 %v561
    %603 = vmatprep.subr.mxu0 0.0
    %604 = vmatpush1.msra.mxu0 %v560
    %605 = vmatprep.subr.mxu0 0.0
    %606 = vmatpush1.msra.mxu0 %v559
    %607 = vmatprep.subr.mxu0 0.0
    %608 = vmatpush2.msra.mxu0 0.0
    %609 = vmatprep.subr.mxu0 0.0
    %610 = vmatpush2.msra.mxu0 0.0
    %611 = vmatprep.subr.mxu0 0.0
    %612 = vmatpush2.msra.mxu0 0.0
    %613 = vmatprep.subr.mxu0 0.0
    %614 = vmatpush2.msra.mxu0 0.0
    %615 = vmatprep.subr.mxu0 0.0
    %616 = vmatpush2.msra.mxu0 0.0
    %617 = vmatprep.subr.mxu0 0.0
    %618 = vmatpush2.msra.mxu0 0.0
    %619 = vmatprep.subr.mxu0 0.0
    %620 = vmatpush2.msra.mxu0 0.0
    %621 = vmatprep.subr.mxu0 0.0
    %622 = vmatpush2.msra.mxu0 0.0
    %623 = vmatprep.subr.mxu0 0.0
    %624 = vmatpush2.msra.mxu0 0.0
    %625 = vmatprep.subr.mxu0 0.0
    %626 = vmatpush2.msra.mxu0 0.0
    %627 = vmatprep.subr.mxu0 0.0
    %628 = vmatpush2.msra.mxu0 0.0
    %629 = vmatprep.subr.mxu0 0.0
    %630 = vmatpush2.msra.mxu0 0.0
    %631 = vmatprep.subr.mxu0 0.0
    %632 = vmatpush2.msra.mxu0 0.0
    %633 = vmatprep.subr.mxu0 0.0
    %634 = vmatpush2.msra.mxu0 0.0
    %635 = vmatprep.subr.mxu0 0.0
    %636 = vmatpush2.msra.mxu0 0.0
    %637 = vmatprep.subr.mxu0 0.0
    %638 = vmatpush2.msra.mxu0 0.0
    %639 = vmatprep.mubr.f32.mxu0 0.0
    %640 = vmatmul.mubr.f32.gmra.mxu0 %v541
    %v641 = vpop.f32.mrf.mxu0
    %v642 = vadd.f32 0.0, %v641
    %v643 = vpop.f32.mrf.mxu0
    %644 = vdwg.mxu0
    %645 = vmatprep.subr.mxu0 0.0
    %646 = vmatpush1.msra.mxu0 %v558
    %647 = vmatprep.subr.mxu0 0.0
    %648 = vmatpush1.msra.mxu0 %v557
    %649 = vmatprep.subr.mxu0 0.0
    %650 = vmatpush1.msra.mxu0 %v556
    %651 = vmatprep.subr.mxu0 0.0
    %652 = vmatpush1.msra.mxu0 %v555
    %653 = vmatprep.subr.mxu0 0.0
    %654 = vmatpush1.msra.mxu0 %v554
    %655 = vmatprep.subr.mxu0 0.0
    %656 = vmatpush1.msra.mxu0 %v553
    %657 = vmatprep.subr.mxu0 0.0
    %658 = vmatpush1.msra.mxu0 %v552
    %659 = vmatprep.subr.mxu0 0.0
    %660 = vmatpush1.msra.mxu0 %v551
    %661 = vmatprep.subr.mxu0 0.0
    %662 = vmatpush1.msra.mxu0 %v550
    %663 = vmatprep.subr.mxu0 0.0
    %664 = vmatpush1.msra.mxu0 %v549
    %665 = vmatprep.subr.mxu0 0.0
    %666 = vmatpush1.msra.mxu0 %v548
    %667 = vmatprep.subr.mxu0 0.0
    %668 = vmatpush1.msra.mxu0 %v547
    %669 = vmatprep.subr.mxu0 0.0
    %670 = vmatpush1.msra.mxu0 %v546
    %671 = vmatprep.subr.mxu0 0.0
    %672 = vmatpush1.msra.mxu0 %v545
    %673 = vmatprep.subr.mxu0 0.0
    %674 = vmatpush1.msra.mxu0 %v544
    %675 = vmatprep.subr.mxu0 0.0
    %676 = vmatpush1.msra.mxu0 %v543
    %677 = vmatprep.subr.mxu0 0.0
    %678 = vmatpush2.msra.mxu0 0.0
    %679 = vmatprep.subr.mxu0 0.0
    %680 = vmatpush2.msra.mxu0 0.0
    %681 = vmatprep.subr.mxu0 0.0
    %682 = vmatpush2.msra.mxu0 0.0
    %683 = vmatprep.subr.mxu0 0.0
    %684 = vmatpush2.msra.mxu0 0.0
    %685 = vmatprep.subr.mxu0 0.0
    %686 = vmatpush2.msra.mxu0 0.0
    %687 = vmatprep.subr.mxu0 0.0
    %688 = vmatpush2.msra.mxu0 0.0
    %689 = vmatprep.subr.mxu0 0.0
    %690 = vmatpush2.msra.mxu0 0.0
    %691 = vmatprep.subr.mxu0 0.0
    %692 = vmatpush2.msra.mxu0 0.0
    %693 = vmatprep.subr.mxu0 0.0
    %694 = vmatpush2.msra.mxu0 0.0
    %695 = vmatprep.subr.mxu0 0.0
    %696 = vmatpush2.msra.mxu0 0.0
    %697 = vmatprep.subr.mxu0 0.0
    %698 = vmatpush2.msra.mxu0 0.0
    %699 = vmatprep.subr.mxu0 0.0
    %700 = vmatpush2.msra.mxu0 0.0
    %701 = vmatprep.subr.mxu0 0.0
    %702 = vmatpush2.msra.mxu0 0.0
    %703 = vmatprep.subr.mxu0 0.0
    %704 = vmatpush2.msra.mxu0 0.0
    %705 = vmatprep.subr.mxu0 0.0
    %706 = vmatpush2.msra.mxu0 0.0
    %707 = vmatprep.subr.mxu0 0.0
    %708 = vmatpush2.msra.mxu0 0.0
    %709 = vmatprep.mubr.f32.mxu0 0.0
    %710 = vmatmul.mubr.f32.gmra.mxu0 %v542
    %v711 = vpop.f32.mrf.mxu0
    %v712 = vadd.f32 %v642, %v711
    %v713 = vpop.f32.mrf.mxu0
    %714 = vdwg.mxu0
    %v715 = vld [vmem:[%s7] sm:$0x1]
    %v717 = vlaneseq
    %v718 = vshrl.u32 %v717, 7
    %v719 = vsub.s32 0, %v718
    %v720 = vrot.slane %v715, %v719
    %v722 = vadd.f32 %v712, %v720
    %v723 = vmax.f32 %v722, 0.0
    %v724 = vld [vmem:[#allocation10] sm:$0xff]
    %v725 = vld [vmem:[#allocation10 + $0x8] sm:$0xff]
    %v726 = vld [vmem:[#allocation10 + $0x10] sm:$0xff]
    %v727 = vld [vmem:[#allocation10 + $0x18] sm:$0xff]
    %v728 = vld [vmem:[#allocation10 + $0x20] sm:$0xff]
    %v729 = vld [vmem:[#allocation10 + $0x28] sm:$0xff]
    %v730 = vld [vmem:[#allocation10 + $0x30] sm:$0xff]
    %v731 = vld [vmem:[#allocation10 + $0x38] sm:$0xff]
    %v732 = vld [vmem:[#allocation10 + $0x40] sm:$0xff]
    %v733 = vld [vmem:[#allocation10 + $0x48] sm:$0xff]
    %v734 = vld [vmem:[#allocation10 + $0x50] sm:$0xff]
    %v735 = vld [vmem:[#allocation10 + $0x58] sm:$0xff]
    %v736 = vld [vmem:[#allocation10 + $0x60] sm:$0xff]
    %v737 = vld [vmem:[#allocation10 + $0x68] sm:$0xff]
    %v738 = vld [vmem:[#allocation10 + $0x70] sm:$0xff]
    %v739 = vld [vmem:[#allocation10 + $0x78] sm:$0xff]
    %v740 = vld [vmem:[%s9] sm:$0x1]
    %v742 = vlaneseq
    %v743 = vshrl.u32 %v742, 7
    %v744 = vsub.s32 0, %v743
    %v745 = vrot.slane %v740, %v744
    %747 = vmatprep.subr.mxu0 0.0
    %748 = vmatpush1.msra.mxu0 %v739
    %749 = vmatprep.subr.mxu0 0.0
    %750 = vmatpush1.msra.mxu0 %v738
    %751 = vmatprep.subr.mxu0 0.0
    %752 = vmatpush1.msra.mxu0 %v737
    %753 = vmatprep.subr.mxu0 0.0
    %754 = vmatpush1.msra.mxu0 %v736
    %755 = vmatprep.subr.mxu0 0.0
    %756 = vmatpush1.msra.mxu0 %v735
    %757 = vmatprep.subr.mxu0 0.0
    %758 = vmatpush1.msra.mxu0 %v734
    %759 = vmatprep.subr.mxu0 0.0
    %760 = vmatpush1.msra.mxu0 %v733
    %761 = vmatprep.subr.mxu0 0.0
    %762 = vmatpush1.msra.mxu0 %v732
    %763 = vmatprep.subr.mxu0 0.0
    %764 = vmatpush1.msra.mxu0 %v731
    %765 = vmatprep.subr.mxu0 0.0
    %766 = vmatpush1.msra.mxu0 %v730
    %767 = vmatprep.subr.mxu0 0.0
    %768 = vmatpush1.msra.mxu0 %v729
    %769 = vmatprep.subr.mxu0 0.0
    %770 = vmatpush1.msra.mxu0 %v728
    %771 = vmatprep.subr.mxu0 0.0
    %772 = vmatpush1.msra.mxu0 %v727
    %773 = vmatprep.subr.mxu0 0.0
    %774 = vmatpush1.msra.mxu0 %v726
    %775 = vmatprep.subr.mxu0 0.0
    %776 = vmatpush1.msra.mxu0 %v725
    %777 = vmatprep.subr.mxu0 0.0
    %778 = vmatpush1.msra.mxu0 %v724
    %779 = vmatprep.subr.mxu0 0.0
    %780 = vmatpush2.msra.mxu0 0.0
    %781 = vmatprep.subr.mxu0 0.0
    %782 = vmatpush2.msra.mxu0 0.0
    %783 = vmatprep.subr.mxu0 0.0
    %784 = vmatpush2.msra.mxu0 0.0
    %785 = vmatprep.subr.mxu0 0.0
    %786 = vmatpush2.msra.mxu0 0.0
    %787 = vmatprep.subr.mxu0 0.0
    %788 = vmatpush2.msra.mxu0 0.0
    %789 = vmatprep.subr.mxu0 0.0
    %790 = vmatpush2.msra.mxu0 0.0
    %791 = vmatprep.subr.mxu0 0.0
    %792 = vmatpush2.msra.mxu0 0.0
    %793 = vmatprep.subr.mxu0 0.0
    %794 = vmatpush2.msra.mxu0 0.0
    %795 = vmatprep.subr.mxu0 0.0
    %796 = vmatpush2.msra.mxu0 0.0
    %797 = vmatprep.subr.mxu0 0.0
    %798 = vmatpush2.msra.mxu0 0.0
    %799 = vmatprep.subr.mxu0 0.0
    %800 = vmatpush2.msra.mxu0 0.0
    %801 = vmatprep.subr.mxu0 0.0
    %802 = vmatpush2.msra.mxu0 0.0
    %803 = vmatprep.subr.mxu0 0.0
    %804 = vmatpush2.msra.mxu0 0.0
    %805 = vmatprep.subr.mxu0 0.0
    %806 = vmatpush2.msra.mxu0 0.0
    %807 = vmatprep.subr.mxu0 0.0
    %808 = vmatpush2.msra.mxu0 0.0
    %809 = vmatprep.subr.mxu0 0.0
    %810 = vmatpush2.msra.mxu0 0.0
    %811 = vmatprep.mubr.f32.mxu0 0.0
    %812 = vmatmul.mubr.f32.gmra.mxu0 %v723
    %v813 = vpop.f32.mrf.mxu0
    %v814 = vadd.f32 %v745, %v813
    %v815 = vpop.f32.mrf.mxu0
    %816 = vdwg.mxu0
    %817 = vst [vmem:[#allocation11] sm:$0x3] %v814
    // Predicated region
    $region54: #{tpu_custom_call.1} parent=1 // pred_check
      _
    $region55: #{tpu_custom_call.1} parent=1 // pred_check_branch
      %819 = sbr.rel (0) target = $region57
    $region56: #{tpu_custom_call.1} parent=1 // pred_region
      %s821 = ssub.s32 32, 32
      %822 = vsyncadd [#allocation7], %s821
      %s824 = sshll.u32 [#allocation11], 4
      %s825 = int_to_ptr.vmem [resolvable:$true] %s824
      %827 = dma.vmem_to_hbm [thread:$0]  %s825, 32, %s10, [#allocation7]
    $region57: #{tpu_custom_call.1} parent=1 // pred_fallthru
      _
    // Predicated region
    $region58: #{tpu_custom_call.1} parent=1 // pred_check
      _
    $region59: #{tpu_custom_call.1} parent=1 // pred_check_branch
      %829 = sbr.rel (0) target = $region61
    $region60: #{tpu_custom_call.1} parent=1 // pred_region
      %830 = dma.done [#allocation7], 32
    $region61: #{tpu_custom_call.1} parent=1 // pred_fallthru
      _
    %831 = vsyncpa [#allocation6], 1
    %832 = vsyncpa [#allocation9], 1
    %833 = vsyncpa [#allocation7], 1

</llo_original>
